<compile_context>
chip_gen: v7x
topology: tpu7x:2x2x1
jax: 0.10.0
libtpu: 0.0.40
codegen_flags: <defaults>
</compile_context>

<pallas_src>
from math import prod

import jax
import jax.numpy as jnp
from jax.experimental import pallas as pl
from jax.experimental.pallas import tpu as pltpu

_LANES = 128
_TARGET_CHUNK_BYTES = 16 * 1024 * 1024   # ~16 MiB per DMA
_MAX_DMA_CHUNKS = 8                      # bound concurrent DMAs / semaphores


# ---------------------------------------------------------------------------
# Helpers
# ---------------------------------------------------------------------------
def _sublane_multiple(dtype):
    """Sublane packing for supported itemsizes; None => unsupported (fallback)."""
    itemsize = jnp.dtype(dtype).itemsize
    return {4: 8, 2: 16, 1: 32}.get(itemsize)   # 8-byte dtypes -> None


def _chunk_plan(rows, lanes, itemsize, sublane, chunk_bytes):
    """Static (start, size) row-chunks: sublane-aligned starts, <=8 chunks."""
    total_bytes = rows * lanes * itemsize
    n_chunks = int(max(1, min(_MAX_DMA_CHUNKS, total_bytes // chunk_bytes)))
    chunk_rows = -(-rows // n_chunks)                       # ceil
    chunk_rows = max(sublane, -(-chunk_rows // sublane) * sublane)
    plan = []
    start = 0
    while start < rows:
        size = min(chunk_rows, rows - start)
        plan.append((start, size))
        start += size
    return plan


def _make_dma_copy_kernel(plan):
    """Kernel issuing all chunk DMAs (HBM->HBM), then waiting on all of them."""

    def kernel(x_hbm, o_hbm, sems):
        copies = []
        for c, (start, size) in enumerate(plan):
            copies.append(
                pltpu.make_async_copy(
                    x_hbm.at[pl.ds(start, size), :],
                    o_hbm.at[pl.ds(start, size), :],
                    sems.at[c],
                )
            )
        for cp in copies:      # start all -> concurrent DMA streams
            cp.start()
        for cp in copies:
            cp.wait()

    return kernel


def _pallas_flat_copy(flat_2d, *, chunk_bytes=_TARGET_CHUNK_BYTES):
    """Bit-exact copy of a (rows, 128) buffer via direct HBM->HBM DMA.

    No VMEM staging, no grid: the kernel body only issues/awaits DMAs.
    Caller guarantees the dtype has a supported (1/2/4-byte) itemsize.
    """
    rows, lanes = flat_2d.shape
    itemsize = jnp.dtype(flat_2d.dtype).itemsize
    sublane = _sublane_multiple(flat_2d.dtype)
    plan = _chunk_plan(rows, lanes, itemsize, sublane, chunk_bytes)

    bytes_accessed = 2 * rows * lanes * itemsize   # read + write
    return pl.pallas_call(
        _make_dma_copy_kernel(plan),
        out_shape=jax.ShapeDtypeStruct((rows, lanes), flat_2d.dtype),
        in_specs=[pl.BlockSpec(memory_space=pl.ANY)],
        out_specs=pl.BlockSpec(memory_space=pl.ANY),
        scratch_shapes=[pltpu.SemaphoreType.DMA((len(plan),))],
        compiler_params=pltpu.CompilerParams(has_side_effects=True),
        cost_estimate=pl.CostEstimate(
            flops=0, transcendentals=0, bytes_accessed=bytes_accessed
        ),
    )(flat_2d)


# ---------------------------------------------------------------------------
# Reshape module (JAX / Pallas version of dss.util.Reshape)
# ---------------------------------------------------------------------------
class Reshape:
    """Reshape to `shape`.

    Entries may be:
      * int  -> absolute size
      * str  -> index (or '*'-joined indices) into the *input* tensor's shape,
                e.g. Reshape(1, 1, "2*3") on (1, 1, 64, 64) -> (1, 1, 4096).

    By default the forward pass is a metadata-only reshape (free, identical to
    torch.reshape on a contiguous tensor).  Set `use_pallas_copy=True` to route
    the flat element buffer through an explicit Pallas HBM->HBM DMA copy.
    Note: when the element count is not a multiple of 128 (or the dtype is
    8-byte), the copy path falls back to the free metadata reshape.
    """

    def __init__(self, *shape, use_pallas_copy: bool = False):
        if isinstance(shape[0], tuple):
            shape = shape[0]
        self.shape = shape
        self.use_pallas_copy = use_pallas_copy

    def _resolve_shape(self, in_shape):
        relative_dim = lambda s: in_shape[int(s)]
        return tuple(
            prod(map(relative_dim, d.split("*"))) if isinstance(d, str) else d
            for d in self.shape
        )

    def __call__(self, x):
        target_shape = self._resolve_shape(x.shape)

        if not self.use_pallas_copy:
            # Hot path: metadata-only reshape; no HBM traffic.
            return jnp.reshape(x, target_shape)

        n = x.size
        sublane = _sublane_multiple(x.dtype)
        if n == 0 or sublane is None or n % _LANES != 0:
            # Unsupported dtype / non-lane-multiple size: metadata-only reshape.
            return jnp.reshape(x, target_shape)

        flat_2d = jnp.reshape(x, (n // _LANES, _LANES))
        copied = _pallas_flat_copy(flat_2d)
        # Applying the target shape on the contiguous result is metadata-only.
        return jnp.reshape(copied, target_shape)


# ---------------------------------------------------------------------------
# Demo / self-test
# ---------------------------------------------------------------------------
if __name__ == "__main__":
    key = jax.random.PRNGKey(0)
    # NCHW conv-style input at small shapes: batch=2, channels=4, spatial=16x16.
    x = jax.random.normal(key, (2, 4, 16, 16), dtype=jnp.float32)
    expected = jnp.reshape(x, (2, 4, 16 * 16))

    # 1) Default (metadata-only) path.
    y_fast = jax.block_until_ready(Reshape("0", "1", "2*3")(x))
    assert y_fast.shape == (2, 4, 256), y_fast.shape
    assert y_fast.dtype == x.dtype
    assert bool(jnp.array_equal(y_fast, expected))

    # 2) Explicit Pallas HBM->HBM DMA copy path (exercises the kernel).
    y_kernel = jax.block_until_ready(Reshape("0", "1", "2*3", use_pallas_copy=True)(x))
    assert y_kernel.shape == (2, 4, 256), y_kernel.shape
    assert y_kernel.dtype == x.dtype
    assert bool(jnp.array_equal(y_kernel, expected))

    # 3) Absolute-int shape spec with -1 resolution, through the kernel path.
    y2 = jax.block_until_ready(Reshape(2, -1, use_pallas_copy=True)(x))
    assert y2.shape == (2, 4 * 16 * 16)
    assert bool(jnp.array_equal(y2, jnp.reshape(x, (2, -1))))

    # 4) Force the multi-chunk concurrent-DMA path with a tiny chunk target.
    z = jax.random.normal(jax.random.PRNGKey(0), (32, 128), dtype=jnp.float32)
    z_copy = jax.block_until_ready(_pallas_flat_copy(z, chunk_bytes=4 * 1024))
    assert z_copy.shape == z.shape
    assert bool(jnp.array_equal(z_copy, z))

    print("KERNEL_OK")
</pallas_src>

<mosaic_0001>
module attributes {stable_mosaic.version = 11 : i64} {
  func.func @kernel(%arg0: memref<16x128xf32, #tpu.memory_space<any>>, %arg1: memref<16x128xf32, #tpu.memory_space<any>>, %arg2: memref<1x!tpu.dma_semaphore, #tpu.memory_space<semaphore_mem>>) attributes {dimension_semantics = [], scalar_prefetch = 0 : i64, scratch_operands = 1 : i64, tpu.core_type = #tpu.core_type<tc>} {
    %c0_i32 = arith.constant 0 : i32
    %c0_i32_0 = arith.constant 0 : i32
    %c0_i32_1 = arith.constant 0 : i32
    %0 = tpu.memref_slice %arg0[%c0_i32_0, %c0_i32_1] : memref<16x128xf32, #tpu.memory_space<any>> -> memref<16x128xf32, #tpu.memory_space<any>>
    %c0_i32_2 = arith.constant 0 : i32
    %c0_i32_3 = arith.constant 0 : i32
    %1 = tpu.memref_slice %arg1[%c0_i32_2, %c0_i32_3] : memref<16x128xf32, #tpu.memory_space<any>> -> memref<16x128xf32, #tpu.memory_space<any>>
    %2 = tpu.memref_slice %arg2[%c0_i32] : memref<1x!tpu.dma_semaphore, #tpu.memory_space<semaphore_mem>> -> memref<1x!tpu.dma_semaphore, #tpu.memory_space<semaphore_mem>>
    %3 = tpu.memref_squeeze %2 : memref<1x!tpu.dma_semaphore, #tpu.memory_space<semaphore_mem>> -> memref<!tpu.dma_semaphore, #tpu.memory_space<semaphore_mem>>
    tpu.enqueue_dma source(%0 : memref<16x128xf32, #tpu.memory_space<any>>) target(%1 : memref<16x128xf32, #tpu.memory_space<any>>) target_semaphore(%3 : memref<!tpu.dma_semaphore, #tpu.memory_space<semaphore_mem>>)
    %c0_i32_4 = arith.constant 0 : i32
    %c0_i32_5 = arith.constant 0 : i32
    %c0_i32_6 = arith.constant 0 : i32
    %4 = tpu.memref_slice %arg0[%c0_i32_5, %c0_i32_6] : memref<16x128xf32, #tpu.memory_space<any>> -> memref<16x128xf32, #tpu.memory_space<any>>
    %c0_i32_7 = arith.constant 0 : i32
    %c0_i32_8 = arith.constant 0 : i32
    %5 = tpu.memref_slice %arg1[%c0_i32_7, %c0_i32_8] : memref<16x128xf32, #tpu.memory_space<any>> -> memref<16x128xf32, #tpu.memory_space<any>>
    %6 = tpu.memref_slice %arg2[%c0_i32_4] : memref<1x!tpu.dma_semaphore, #tpu.memory_space<semaphore_mem>> -> memref<1x!tpu.dma_semaphore, #tpu.memory_space<semaphore_mem>>
    %7 = tpu.memref_squeeze %6 : memref<1x!tpu.dma_semaphore, #tpu.memory_space<semaphore_mem>> -> memref<!tpu.dma_semaphore, #tpu.memory_space<semaphore_mem>>
    tpu.wait_dma2 semaphore(%7 : memref<!tpu.dma_semaphore, #tpu.memory_space<semaphore_mem>>) src(%4 : memref<16x128xf32, #tpu.memory_space<any>>) dst(%5 : memref<16x128xf32, #tpu.memory_space<any>>)
    return
  }
}

</mosaic_0001>

<llo_original>
// kernel: tpu_custom_call.1
$region0: #{tpu_custom_call.1}
  #allocation0 [shape = 'u32[]', space=smem, size = 0x4, offset = 0x4, fixed_abs, tag = 'smem constant byte address 0x4 - core index']
  #allocation1 [shape = 'u32[144,128]{1,0:T(1,128)}', space=vmem, size = 0x12000, scoped, tag = 'internal scratch']
  #allocation2 [shape = 's32[1]{0}', space=sflag, size = 0x4, scoped, tag = 'scratch operand']
  #allocation3 [shape = 's32[]', space=sflag, size = 0x4, offset = 0, fixed_abs, tag = 'sflag constant byte address 0x0 - dummy sync flag']
  #allocation4 [shape = 'u32[0]{0}', space=smem, size = 0, offset = 0, fixed_abs, tag = 'smem constant byte address 0x0 - null']
  %s0 = inlined_call_operand.hbm [shape: f32[16,128], index: 0, kind: input, shape index: {}]
  %s1 = inlined_call_operand.hbm [shape: f32[16,128], index: 1, kind: output, shape index: {}]
  %s2 = sld [smem:[#allocation0]]
  $region2: #{tpu_custom_call.1} parent=0
    _
  %s4 = ssub.s32 1, %s2
  %s5 = scalar_select 0, %s4, %s2
  %s7 = sshll.u32 1, 14
  %s8 = sxor.u32 4294967295, %s7
  %s11 = sshll.u32 3, 24
  %s12 = sxor.u32 4294967295, %s11
  %s13 = sand.u32 0, %s12
  %s15 = sor.u32 %s13, 0
  %18 = dma.general %s0, 256, %s1, [#allocation2], [#allocation3], [#allocation4], %s15, 0
  %s19 = smul.u32 16, 1
  %s20 = sshll.u32 %s19, 4
  %21 = dma.done [#allocation2], %s20
  %22 = vsyncmov [#allocation2]
  %s23 = vpop.sfrf %22
  %p24 = scmp.eq.s32.totalorder %s23, 0
  %p25 = pneg %p24
  %27 = shalt.err (%p25)

</llo_original>
